<compile_context>
chip_gen: v7x
topology: tpu7x:2x2x1
jax: 0.10.0
libtpu: 0.0.40
codegen_flags: <defaults>
</compile_context>

<pallas_src>
import functools

import jax
import jax.numpy as jnp
from jax.experimental import pallas as pl
from jax.experimental.pallas import tpu as pltpu

_SMOOTH = 1e-10


def _c_loss_kernel(x_ref, out_ref, *, w2, w3, apply_softmax, ts1, hw_true,
                   need_mask):
    """One (batch-tile, spatial-tile) block -> lane-dense (1, 8, 128) partial.

    x_ref:  (bn, c_blk, ts1, 128) block.  softmax path: c_blk == C (all
            channels needed for the denominator).  plain path: c_blk == 2,
            holding only channels [2, 4).
    out_ref: (1, 8, 128) per-step partial (unmasked lane-dense store); the tiny
            cross-lane / cross-step reduce happens in plain JAX outside.
    """
    x = x_ref[...].astype(jnp.float32)               # (bn, c_blk, ts1, 128)
    bn = x.shape[0]

    if apply_softmax:
        n_ch = x.shape[1]
        m = jnp.max(x, axis=1)                        # (bn, ts1, 128)
        # Accumulate the softmax denominator channel-by-channel; keep only the
        # two exponentials we actually need (no full exp slab in VMEM).
        s = None
        e2 = None
        e3 = None
        for c in range(n_ch):
            ec = jnp.exp(x[:, c] - m)
            s = ec if s is None else s + ec
            if c == 2:
                e2 = ec
            elif c == 3:
                e3 = ec
        log_s = jnp.log(s)
        # -log(1 - e_c/s + eps) == log(s) - log(s - e_c + eps*s)
        d2 = s - e2 + _SMOOTH * s
        d3 = s - e3 + _SMOOTH * s
        if w2 == w3:
            terms = w2 * (2.0 * log_s - jnp.log(d2 * d3))
        else:
            terms = (w2 * (log_s - jnp.log(d2)) +
                     w3 * (log_s - jnp.log(d3)))
    else:
        x2 = x[:, 0]                                  # channel 2
        x3 = x[:, 1]                                  # channel 3
        a2 = 1.0 - x2 + _SMOOTH
        a3 = 1.0 - x3 + _SMOOTH
        if w2 == w3:
            terms = (-w2) * jnp.log(a2 * a3)          # one log instead of two
        else:
            terms = -(w2 * jnp.log(a2) + w3 * jnp.log(a3))

    if need_mask:
        # Zero out spatial padding (only the last spatial tile has any).
        s_idx = pl.program_id(1)
        row = jax.lax.broadcasted_iota(jnp.int32, (ts1, 128), 0)
        lane = jax.lax.broadcasted_iota(jnp.int32, (ts1, 128), 1)
        gidx = (s_idx * ts1 + row) * 128 + lane
        terms = jnp.where((gidx < hw_true)[None, :, :], terms, 0.0)

    # (bn, ts1, 128) -> (8, 128): batch + sublane-group reduce with VPU adds
    # only; lanes kept intact, store is a full unmasked (8, 128) tile.
    rows = bn * ts1                                   # multiple of 8
    partial = jnp.sum(terms.reshape(rows // 8, 8, 128), axis=0)
    out_ref[...] = partial.reshape(1, 8, 128)


def _mult8_divisors(s1):
    base = s1 // 8
    return [8 * d for d in range(1, base + 1) if base % d == 0]


def _divisors(n):
    return [d for d in range(1, n + 1) if n % d == 0]


def closs_forward(inputs, target=None, weight=None, softmax=False, *,
                  n_classes=4):
    """Pallas implementation of CLoss.forward.

    inputs: (N, C, H, W) float array with C == n_classes >= 4.
    target: unused by the reference forward (kept for signature parity).
    Note: the non-softmax path assumes inputs lie in (0, 1) (as the reference
    does); values >= 1 produce NaNs in both kernel and reference.
    """
    del target  # not used by the PyTorch forward
    N, C, H, W = inputs.shape
    assert C == n_classes and C >= 4

    if weight is None:
        weight = [1] * n_classes
    w2 = float(weight[2])
    w3 = float(weight[3])

    apply_softmax = bool(softmax)
    # Without softmax only channels 2 and 3 are ever read -> fetch just that
    # pair (channel block of size 2 at channel-block index 1).
    c_blk = C if apply_softmax else 2
    c_idx = 0 if apply_softmax else 1

    # ---- lane-dense spatial layout: pad H*W up to a multiple of 8*128 ------
    HW = H * W
    HW_pad = -(-HW // 1024) * 1024
    need_mask = HW_pad != HW
    x = inputs.reshape(N, C, HW)
    if need_mask:
        x = jnp.pad(x, ((0, 0), (0, 0), (0, HW_pad - HW)))
    S1 = HW_pad // 128                                # multiple of 8
    x = x.reshape(N, C, S1, 128)

    itemsize = jnp.dtype(inputs.dtype).itemsize

    # ---- device-aware tile target ------------------------------------------
    try:
        vmem_cap = int(getattr(pltpu.get_tpu_info(), "vmem_capacity_bytes",
                               64 << 20))
    except Exception:  # pragma: no cover - conservative fallback
        vmem_cap = 64 << 20
    # v5e / v6e (128 MiB VMEM): ~6 MiB input tiles; v7x (64 MiB): ~3 MiB.
    target_bytes = (6 << 20) if vmem_cap >= (100 << 20) else (3 << 20)

    per_row_bytes = c_blk * 128 * itemsize            # one sublane row / step
    rows_target = max(8, target_bytes // per_row_bytes)

    ts_cands = _mult8_divisors(S1)                    # multiples of 8 | S1
    bn_cands = _divisors(N)
    ts1 = max([t for t in ts_cands if t <= rows_target], default=8)
    bn = max([b for b in bn_cands if b * ts1 <= rows_target], default=1)

    # Guarantee enough grid steps to pipeline and shard across TensorCores.
    min_steps = 4

    def _steps(bn_, ts_):
        return (N // bn_) * (S1 // ts_)

    while _steps(bn, ts1) < min_steps:
        if bn > 1:
            bn = max(b for b in bn_cands if b < bn)
        elif ts1 > 8:
            ts1 = max(t for t in ts_cands if t < ts1)
        else:
            break

    nb = N // bn
    ns = S1 // ts1
    num_steps = nb * ns

    # ---- VMEM budget from the actual footprint -----------------------------
    in_tile = bn * c_blk * ts1 * 128 * itemsize       # one input buffer
    f32_tile = bn * ts1 * 128 * 4
    live_f32 = (c_blk + 6) if apply_softmax else 5    # live f32 slabs (approx)
    footprint = 2 * in_tile + live_f32 * f32_tile + 2 * (8 * 128 * 4)
    vmem_limit = int(min(max(2 * footprint, 16 << 20), 48 << 20))

    # ---- advisory cost estimate --------------------------------------------
    n_elem = N * HW
    if apply_softmax:
        flops = n_elem * (6 * C + 12)
        transcendentals = n_elem * (C + (2 if w2 == w3 else 3))
    else:
        flops = n_elem * 8
        transcendentals = n_elem * (1 if w2 == w3 else 2)
    cost = pl.CostEstimate(
        flops=int(flops),
        transcendentals=int(transcendentals),
        bytes_accessed=int(N * c_blk * HW_pad * itemsize
                           + num_steps * 8 * 128 * 4),
    )

    kernel = functools.partial(
        _c_loss_kernel, w2=w2, w3=w3, apply_softmax=apply_softmax,
        ts1=ts1, hw_true=HW, need_mask=need_mask)

    partials = pl.pallas_call(
        kernel,
        out_shape=jax.ShapeDtypeStruct((num_steps, 8, 128), jnp.float32),
        grid_spec=pltpu.PrefetchScalarGridSpec(
            num_scalar_prefetch=0,
            grid=(nb, ns),
            in_specs=[
                pl.BlockSpec((bn, c_blk, ts1, 128),
                             lambda b, s: (b, c_idx, s, 0)),
            ],
            out_specs=pl.BlockSpec((1, 8, 128),
                                   lambda b, s: (b * ns + s, 0, 0)),
        ),
        compiler_params=pltpu.CompilerParams(
            dimension_semantics=("parallel", "parallel"),
            vmem_limit_bytes=vmem_limit,
        ),
        cost_estimate=cost,
    )(x)

    # Tiny final cross-lane / cross-step reduction + normalization in JAX.
    return jnp.sum(partials) / (w2 + w3)


def closs_reference(inputs, weight=None, softmax=False, *, n_classes=4):
    """Pure-JAX reference matching the PyTorch semantics exactly."""
    x = inputs.astype(jnp.float32)
    if softmax:
        x = jax.nn.softmax(x, axis=1)
    if weight is None:
        weight = [1] * n_classes
    smooth = 1e-10
    loss = 0.0
    for i in (2, 3):
        c = -jnp.sum(jnp.log(1.0 - x[:, i] + smooth))
        loss = loss + c * weight[i]
    return loss / (weight[2] + weight[3])


if __name__ == "__main__":
    key = jax.random.PRNGKey(0)
    N, C, H, W = 2, 4, 16, 16  # n_classes = 4 (forward indexes channels 2, 3)

    # Raw logits with the softmax path (so 1 - score stays in (0, 1)).
    x = jax.random.normal(key, (N, C, H, W), dtype=jnp.float32)
    out = jax.block_until_ready(closs_forward(x, softmax=True, n_classes=C))
    ref = closs_reference(x, softmax=True, n_classes=C)
    assert jnp.allclose(out, ref, rtol=2e-5, atol=1e-3), (out, ref)

    # No-softmax path with inputs in (0, 1); only channels 2:4 are DMA'd.
    probs = jax.random.uniform(
        jax.random.PRNGKey(1), (N, C, H, W), dtype=jnp.float32,
        minval=0.01, maxval=0.99)
    out2 = jax.block_until_ready(closs_forward(probs, softmax=False,
                                               n_classes=C))
    ref2 = closs_reference(probs, softmax=False, n_classes=C)
    assert jnp.allclose(out2, ref2, rtol=2e-5, atol=1e-3), (out2, ref2)

    # Weighted variant (w2 != w3 exercises the unfused-log path).
    wts = [1.0, 1.0, 0.5, 2.0]
    out3 = jax.block_until_ready(
        closs_forward(probs, weight=wts, softmax=False, n_classes=C))
    ref3 = closs_reference(probs, weight=wts, softmax=False, n_classes=C)
    assert jnp.allclose(out3, ref3, rtol=2e-5, atol=1e-3), (out3, ref3)

    # TODO(synk): target / _one_hot_encoder are unused by the PyTorch forward,
    # so they are intentionally not implemented in the kernel.
    print("KERNEL_OK")
</pallas_src>

<mosaic_0001>
module attributes {stable_mosaic.version = 11 : i64} {
  func.func @_c_loss_kernel(%arg0: i32, %arg1: i32, %arg2: memref<1x4x8x128xf32, #tpu.memory_space<vmem>>, %arg3: memref<1x8x128xf32, #tpu.memory_space<vmem>>) attributes {dimension_semantics = [#tpu.dimension_semantics<parallel>, #tpu.dimension_semantics<parallel>], iteration_bounds = array<i64: 2, 1>, scalar_prefetch = 0 : i64, scratch_operands = 0 : i64, tpu.core_type = #tpu.core_type<tc>, window_params = [{transform_indices = @transform_0, window_bounds = array<i64: 1, 4, 8, 128>}, {transform_indices = @transform_1, window_bounds = array<i64: 1, 8, 128>}]} {
    %c0 = arith.constant 0 : index
    %c0_0 = arith.constant 0 : index
    %c0_1 = arith.constant 0 : index
    %c0_2 = arith.constant 0 : index
    %0 = vector.load %arg2[%c0, %c0_0, %c0_1, %c0_2] : memref<1x4x8x128xf32, #tpu.memory_space<vmem>>, vector<1x4x8x128xf32>
    %cst = arith.constant dense<0xFF800000> : vector<1x8x128xf32>
    %1 = vector.multi_reduction <maximumf>, %0, %cst [1] : vector<1x4x8x128xf32> to vector<1x8x128xf32>
    %2 = vector.extract_strided_slice %0 {offsets = [0, 0, 0, 0], sizes = [1, 1, 8, 128], strides = [1, 1, 1, 1]} : vector<1x4x8x128xf32> to vector<1x1x8x128xf32>
    %3 = vector.shape_cast %2 : vector<1x1x8x128xf32> to vector<1x8x128xf32>
    %4 = arith.subf %3, %1 : vector<1x8x128xf32>
    %5 = math.exp %4 : vector<1x8x128xf32>
    %6 = vector.extract_strided_slice %0 {offsets = [0, 1, 0, 0], sizes = [1, 1, 8, 128], strides = [1, 1, 1, 1]} : vector<1x4x8x128xf32> to vector<1x1x8x128xf32>
    %7 = vector.shape_cast %6 : vector<1x1x8x128xf32> to vector<1x8x128xf32>
    %8 = arith.subf %7, %1 : vector<1x8x128xf32>
    %9 = math.exp %8 : vector<1x8x128xf32>
    %10 = arith.addf %5, %9 : vector<1x8x128xf32>
    %11 = vector.extract_strided_slice %0 {offsets = [0, 2, 0, 0], sizes = [1, 1, 8, 128], strides = [1, 1, 1, 1]} : vector<1x4x8x128xf32> to vector<1x1x8x128xf32>
    %12 = vector.shape_cast %11 : vector<1x1x8x128xf32> to vector<1x8x128xf32>
    %13 = arith.subf %12, %1 : vector<1x8x128xf32>
    %14 = math.exp %13 : vector<1x8x128xf32>
    %15 = arith.addf %10, %14 : vector<1x8x128xf32>
    %16 = vector.extract_strided_slice %0 {offsets = [0, 3, 0, 0], sizes = [1, 1, 8, 128], strides = [1, 1, 1, 1]} : vector<1x4x8x128xf32> to vector<1x1x8x128xf32>
    %17 = vector.shape_cast %16 : vector<1x1x8x128xf32> to vector<1x8x128xf32>
    %18 = arith.subf %17, %1 : vector<1x8x128xf32>
    %19 = math.exp %18 : vector<1x8x128xf32>
    %20 = arith.addf %15, %19 : vector<1x8x128xf32>
    %21 = math.log %20 : vector<1x8x128xf32>
    %22 = arith.subf %20, %14 : vector<1x8x128xf32>
    %cst_3 = arith.constant 1.000000e-10 : f32
    %23 = vector.broadcast %cst_3 : f32 to vector<1x8x128xf32>
    %24 = arith.mulf %23, %20 : vector<1x8x128xf32>
    %25 = arith.addf %22, %24 : vector<1x8x128xf32>
    %26 = arith.subf %20, %19 : vector<1x8x128xf32>
    %cst_4 = arith.constant 1.000000e-10 : f32
    %27 = vector.broadcast %cst_4 : f32 to vector<1x8x128xf32>
    %28 = arith.mulf %27, %20 : vector<1x8x128xf32>
    %29 = arith.addf %26, %28 : vector<1x8x128xf32>
    %cst_5 = arith.constant 2.000000e+00 : f32
    %30 = vector.broadcast %cst_5 : f32 to vector<1x8x128xf32>
    %31 = arith.mulf %30, %21 : vector<1x8x128xf32>
    %32 = arith.mulf %25, %29 : vector<1x8x128xf32>
    %33 = math.log %32 : vector<1x8x128xf32>
    %34 = arith.subf %31, %33 : vector<1x8x128xf32>
    %cst_6 = arith.constant 1.000000e+00 : f32
    %35 = vector.broadcast %cst_6 : f32 to vector<1x8x128xf32>
    %36 = arith.mulf %35, %34 : vector<1x8x128xf32>
    %37 = tpu.iota {dimensions = array<i32: 0>} : vector<8x128xi32>
    %38 = tpu.iota {dimensions = array<i32: 1>} : vector<8x128xi32>
    %c8_i32 = arith.constant 8 : i32
    %39 = arith.muli %arg1, %c8_i32 : i32
    %40 = vector.broadcast %39 : i32 to vector<8x128xi32>
    %41 = arith.addi %40, %37 : vector<8x128xi32>
    %c128_i32 = arith.constant 128 : i32
    %42 = vector.broadcast %c128_i32 : i32 to vector<8x128xi32>
    %43 = arith.muli %41, %42 : vector<8x128xi32>
    %44 = arith.addi %43, %38 : vector<8x128xi32>
    %c256_i32 = arith.constant 256 : i32
    %45 = vector.broadcast %c256_i32 : i32 to vector<8x128xi32>
    %46 = arith.cmpi slt, %44, %45 : vector<8x128xi32>
    %47 = vector.shape_cast %46 : vector<8x128xi1> to vector<1x8x128xi1>
    %cst_7 = arith.constant 0.000000e+00 : f32
    %48 = vector.broadcast %cst_7 : f32 to vector<1x8x128xf32>
    %49 = arith.select %47, %36, %48 : vector<1x8x128xi1>, vector<1x8x128xf32>
    %cst_8 = arith.constant dense<0.000000e+00> : vector<8x128xf32>
    %50 = vector.multi_reduction <add>, %49, %cst_8 [0] : vector<1x8x128xf32> to vector<8x128xf32>
    %51 = vector.shape_cast %50 : vector<8x128xf32> to vector<1x8x128xf32>
    %c0_9 = arith.constant 0 : index
    %c0_10 = arith.constant 0 : index
    %c0_11 = arith.constant 0 : index
    %52 = vector.load %arg3[%c0_9, %c0_10, %c0_11] : memref<1x8x128xf32, #tpu.memory_space<vmem>>, vector<1x8x128xf32>
    tpu.vector_store %arg3[%c0_9, %c0_10, %c0_11], %51 {strides = array<i32>} : memref<1x8x128xf32, #tpu.memory_space<vmem>>, vector<1x8x128xf32>,
    return
  }
  func.func @transform_0(%arg0: i32, %arg1: i32) -> (i32, i32, i32, i32) {
    %c0_i32 = arith.constant 0 : i32
    %c0_i32_0 = arith.constant 0 : i32
    %c0_i32_1 = arith.constant 0 : i32
    return %arg0, %c0_i32, %arg1, %c0_i32_0 : i32, i32, i32, i32
  }
  func.func @transform_1(%arg0: i32, %arg1: i32) -> (i32, i32, i32) {
    %c1_i32 = arith.constant 1 : i32
    %0 = arith.muli %arg0, %c1_i32 : i32
    %1 = arith.addi %0, %arg1 : i32
    %c0_i32 = arith.constant 0 : i32
    %c0_i32_0 = arith.constant 0 : i32
    %c0_i32_1 = arith.constant 0 : i32
    return %1, %c0_i32, %c0_i32_0 : i32, i32, i32
  }
}

</mosaic_0001>

<llo_original>
// kernel: tpu_custom_call.1
$region0: #{tpu_custom_call.1}
  #allocation0 [shape = 'u32[]', space=smem, size = 0x4, offset = 0x4, fixed_abs, tag = 'smem constant byte address 0x4 - core index']
  #allocation1 [shape = 'u32[144,128]{1,0:T(1,128)}', space=vmem, size = 0x12000, scoped, tag = 'internal scratch']
  %s0 = inlined_call_operand.hbm [shape: f32[2,4,8,128], index: 0, kind: input, shape index: {}]
  %s1 = inlined_call_operand.hbm [shape: f32[2,8,128], index: 1, kind: output, shape index: {}]
  %s2 = sld [smem:[#allocation0]]
  $region41: #{tpu_custom_call.1} parent=0
    _
  %s4 = ssub.s32 1, %s2
  %s5 = scalar_select 0, %s4, %s2
  $region1: #{tpu_custom_call.1} parent=0
    #allocation2 [shape = 'u8[32768]{0}', space=vmem, size = 0x8000, scoped, tag = 'input window, operand 0']
    #allocation3 [shape = 's32[2]{0}', space=sflag, size = 0x8, scoped, tag = 'scoped memory for tpu_custom_call.1']
    #allocation4 [shape = 's32[2]{0}', space=sflag, size = 0x8, scoped, tag = 'scoped memory for tpu_custom_call.1']
    #allocation5 [shape = 'u8[8192]{0}', space=vmem, size = 0x2000, scoped, tag = 'output window, operand 0']
    %6 = vsyncpa [#allocation3], 0
    %s7 = scalar_lea.sflag [#allocation3], 1
    %8 = vsyncpa %s7, 0
    %9 = vsyncpa [#allocation4], 0
    %s10 = scalar_lea.sflag [#allocation4], 1
    %11 = vsyncpa %s10, 0
    loop: start=0, step=1, limit=4
    $region2: #{tpu_custom_call.1} parent=1 // loop_pre_header
      _
    $region3: #{tpu_custom_call.1} parent=1 // loop_header
      %s13 = sphi 0, %s17
      %p14 = scmp.ge.s32.totalorder %s13, 4
      %s20 = sphi 0, %s32
      %s21 = sphi 0, %s28
      %s22 = sphi 0, %s20
      %s23 = sphi 0, %s21
      %s24 = sphi 0, %s22
      %s25 = sphi 0, %s23
      %s37 = sphi 0, %s39
      %s40 = sphi 0, %s37
      %s41 = sphi 0, %s40
      %s57 = sphi 0, %s41
      %s65 = sphi 0, %s67
      %s68 = sphi 0, %s65
      %s69 = sphi 0, %s68
      %s85 = sphi 0, %s69
    $region4: #{tpu_custom_call.1} parent=1 // loop_header_branch
      %16 = sbr.rel (%p14) target = $region8
    $region5: #{tpu_custom_call.1} parent=1 // loop_body
      %s18 = ssub.s32 %s13, 1
      %s19 = ssub.s32 %s13, 2
      %s26 = sadd.s32 1, %s21
      %p27 = scmp.ge.s32.totalorder %s26, 1
      %s28 = scalar_select %p27, 0, %s26
      %s29 = sadd.s32 1, %s20
      %s30 = scalar_select %p27, %s29, %s20
      %p31 = scmp.ge.s32.totalorder %s30, 2
      %s32 = scalar_select %p31, 0, %s30
      %s33 = ssub.s32 %s20, %s32
      %s34 = ssub.s32 %s21, %s28
      %s35 = sor.u32 %s33, %s34
      %p36 = scmp.eq.s32.totalorder %s35, 0
      %s38 = sadd.s32 %s37, 1
      %s39 = scalar_select %p36, %s37, %s38
      %p42 = pneg %p36
      %p43 = scmp.eq.s32.totalorder %s13, 1
      %p44 = por %p42, %p43
      %p45 = scmp.ne.s32.totalorder %s37, %s40
      %p46 = scmp.eq.s32.totalorder %s13, 0
      %p47 = por %p45, %p46
      %p48 = scmp.ne.s32.totalorder %s37, %s40
      %p49 = scmp.eq.s32.totalorder %s18, 1
      %p50 = por %p48, %p49
      %p51 = scmp.ne.s32.totalorder %s40, %s41
      %p52 = scmp.eq.s32.totalorder %s18, 0
      %p53 = por %p51, %p52
      %p54 = scmp.ne.s32.totalorder %s40, %s41
      %p55 = scmp.eq.s32.totalorder %s19, 1
      %p56 = por %p54, %p55
      %p58 = scmp.ne.s32.totalorder %s41, %s57
      %p59 = scmp.eq.s32.totalorder %s19, 0
      %p60 = por %p58, %p59
      %s61 = sadd.s32 %s20, %s21
      %s62 = sadd.s32 %s32, %s28
      %s63 = ssub.s32 %s61, %s62
      %p64 = scmp.eq.s32.totalorder %s63, 0
      %s66 = sadd.s32 %s65, 1
      %s67 = scalar_select %p64, %s65, %s66
      %p70 = pneg %p64
      %p71 = scmp.eq.s32.totalorder %s13, 1
      %p72 = por %p70, %p71
      %p73 = scmp.ne.s32.totalorder %s65, %s68
      %p74 = scmp.eq.s32.totalorder %s13, 0
      %p75 = por %p73, %p74
      %p76 = scmp.ne.s32.totalorder %s65, %s68
      %p77 = scmp.eq.s32.totalorder %s18, 1
      %p78 = por %p76, %p77
      %p79 = scmp.ne.s32.totalorder %s68, %s69
      %p80 = scmp.eq.s32.totalorder %s18, 0
      %p81 = por %p79, %p80
      %p82 = scmp.ne.s32.totalorder %s68, %s69
      %p83 = scmp.eq.s32.totalorder %s19, 1
      %p84 = por %p82, %p83
      %p86 = scmp.ne.s32.totalorder %s69, %s85
      %p87 = scmp.eq.s32.totalorder %s19, 0
      %p88 = por %p86, %p87
      %p89 = scmp.le.s32.totalorder 1, %s13
      %p90 = scmp.lt.s32.totalorder %s13, 3
      %p91 = pnand %p89, %p90
      %p92 = pneg %p91
      // Predicated region
      $region9: #{tpu_custom_call.1} parent=5 // pred_check
        _
      $region10: #{tpu_custom_call.1} parent=5 // pred_check_branch
        %94 = sbr.rel (%p91) target = $region12
      $region11: #{tpu_custom_call.1} parent=5 // pred_region
        %s95 = ssub.s32 %s13, 1
      $region12: #{tpu_custom_call.1} parent=5 // pred_fallthru
        _
      %p96 = scmp.lt.s32.totalorder %s13, 2
      // Predicated region
      $region13: #{tpu_custom_call.1} parent=5 // pred_check
        %p97 = pneg %p96
      $region14: #{tpu_custom_call.1} parent=5 // pred_check_branch
        %99 = sbr.rel (%p97) target = $region16
      $region15: #{tpu_custom_call.1} parent=5 // pred_region
        // Predicated region
        $region17: #{tpu_custom_call.1} parent=15 // pred_check
          %p100 = pneg %p47
        $region18: #{tpu_custom_call.1} parent=15 // pred_check_branch
          %102 = sbr.rel (%p100) target = $region20
        $region19: #{tpu_custom_call.1} parent=15 // pred_region
          %s103 = sand.u32 %s37, 1
          %s104 = scalar_lea.sflag [#allocation3], %s103
          %s105 = sand.u32 %s37, 1
          %s106 = smul.addr %s105, 32
          %s107 = scalar_lea.vmem [#allocation2], %s106
          %s109 = ssub.s32 512, 512
          %110 = vsyncadd %s104, %s109
          %s111 = smul.addr %s20, 4
          %s112 = sadd.s32 %s21, %s111
          %s113 = smul.addr %s112, 128
          %s114 = scalar_lea.hbm %s0, %s113
          %s115 = sshll.u32 %s107, 4
          %s116 = int_to_ptr.vmem [resolvable:$true] %s115
          %121 = dma.hbm_to_vmem [thread:$0]  %s114, 512, %s116, %s104, 128, 128, 8
        $region20: #{tpu_custom_call.1} parent=15 // pred_fallthru
          _
      $region16: #{tpu_custom_call.1} parent=5 // pred_fallthru
        _
      %p122 = scmp.le.s32.totalorder 1, %s13
      %p123 = scmp.lt.s32.totalorder %s13, 3
      %p124 = pnand %p122, %p123
      %p125 = pneg %p124
      // Predicated region
      $region21: #{tpu_custom_call.1} parent=5 // pred_check
        _
      $region22: #{tpu_custom_call.1} parent=5 // pred_check_branch
        %127 = sbr.rel (%p124) target = $region24
      $region23: #{tpu_custom_call.1} parent=5 // pred_region
        %s128 = ssub.s32 %s13, 1
        %s129 = sand.u32 %s40, 1
        %s130 = scalar_lea.sflag [#allocation3], %s129
        %s131 = sand.u32 %s40, 1
        %s132 = smul.addr %s131, 32
        %s133 = scalar_lea.vmem [#allocation2], %s132
        // Predicated region
        $region25: #{tpu_custom_call.1} parent=23 // pred_check
          %p134 = pneg %p53
        $region26: #{tpu_custom_call.1} parent=23 // pred_check_branch
          %136 = sbr.rel (%p134) target = $region28
        $region27: #{tpu_custom_call.1} parent=23 // pred_region
          %137 = dma.done %s130, 512
        $region28: #{tpu_custom_call.1} parent=23 // pred_fallthru
          _
        %s138 = sand.u32 %s40, 1
        %s139 = scalar_lea.sflag [#allocation3], %s138
        %s140 = sand.u32 %s40, 1
        %s141 = smul.addr %s140, 32
        %s142 = scalar_lea.vmem [#allocation2], %s141
        %p143 = pneg %p53
        %p144 = pneg %p50
        %p145 = pneg %p81
        %p146 = pneg %p78
        %s147 = sand.u32 %s68, 1
        %s148 = scalar_lea.sflag [#allocation4], %s147
        %s149 = sand.u32 %s68, 1
        %s150 = smul.addr %s149, 8
        %s151 = scalar_lea.vmem [#allocation5], %s150
        %s152 = sadd.s32 %s22, %s23
        %v153 = vld [vmem:[%s133] sm:$0xff]
        %v154 = vld [vmem:[%s133 + $0x8] sm:$0xff]
        %v155 = vld [vmem:[%s133 + $0x10] sm:$0xff]
        %v156 = vld [vmem:[%s133 + $0x18] sm:$0xff]
        %v157 = vmax.f32 %v153, %v154
        %v158 = vmax.f32 %v155, %v156
        %v159 = vmax.f32 %v157, %v158
        %v160 = vsub.f32 %v153, %v159
        %v161 = vmul.f32 %v160, 1.442695
        %v162 = vpow.pop %v161
        %v163 = vsub.f32 %v154, %v159
        %v164 = vmul.f32 %v163, 1.442695
        %v165 = vpow.pop %v164
        %v166 = vadd.f32 %v162, %v165
        %v167 = vsub.f32 %v155, %v159
        %v168 = vmul.f32 %v167, 1.442695
        %v169 = vpow.pop %v168
        %v170 = vadd.f32 %v166, %v169
        %v171 = vsub.f32 %v156, %v159
        %v172 = vmul.f32 %v171, 1.442695
        %v173 = vpow.pop %v172
        %v174 = vadd.f32 %v170, %v173
        %v175 = vlog2.pop %v174
        %v176 = vmul.f32 %v175, 0.6931472
        %v177 = vsub.f32 %v174, %v169
        %v178 = vmul.f32 %v174, 1e-10
        %v179 = vadd.f32 %v177, %v178
        %v180 = vsub.f32 %v174, %v173
        %v181 = vadd.f32 %v180, %v178
        %v182 = vmul.f32 %v176, 2.0
        %v183 = vmul.f32 %v179, %v181
        %v184 = vlog2.pop %v183
        %v185 = vmul.f32 %v184, 0.6931472
        %v186 = vsub.f32 %v182, %v185
        %v187 = vlaneseq
        %v188 = vshrl.u32 %v187, 7
        %v189 = vlaneseq
        %v190 = vand.u32 %v189, 127
        %s191 = smul.u32 %s23, 8
        %v192 = vstv %s191
        %v193 = vadd.s32 %v192, %v188
        %v194 = vmul.u32 %v193, 128
        %v195 = vadd.s32 %v194, %v190
        %vm196 = vcmp.lt.s32.totalorder %v195, 256
        %v197 = vsel %vm196, %v186, 0.0
        %v198 = vadd.f32 %v197, 0.0
        %199 = vst [vmem:[%s151] sm:$0xff] %v198
        %s200 = sand.u32 %s68, 1
        %s201 = scalar_lea.sflag [#allocation4], %s200
        %s202 = sand.u32 %s68, 1
        %s203 = smul.addr %s202, 8
        %s204 = scalar_lea.vmem [#allocation5], %s203
        // Predicated region
        $region29: #{tpu_custom_call.1} parent=23 // pred_check
          %p205 = pneg %p78
        $region30: #{tpu_custom_call.1} parent=23 // pred_check_branch
          %207 = sbr.rel (%p205) target = $region32
        $region31: #{tpu_custom_call.1} parent=23 // pred_region
          %s208 = sadd.s32 %s22, %s23
          %s210 = ssub.s32 128, 128
          %211 = vsyncadd %s201, %s210
          %s212 = smul.addr %s208, 128
          %s213 = scalar_lea.hbm %s1, %s212
          %s215 = sshll.u32 %s204, 4
          %s216 = int_to_ptr.vmem [resolvable:$true] %s215
          %218 = dma.vmem_to_hbm [thread:$0]  %s216, 128, %s213, %s201
        $region32: #{tpu_custom_call.1} parent=23 // pred_fallthru
          _
      $region24: #{tpu_custom_call.1} parent=5 // pred_fallthru
        _
      %p219 = scmp.le.s32.totalorder 2, %s13
      // Predicated region
      $region33: #{tpu_custom_call.1} parent=5 // pred_check
        %p220 = pneg %p219
      $region34: #{tpu_custom_call.1} parent=5 // pred_check_branch
        %222 = sbr.rel (%p220) target = $region36
      $region35: #{tpu_custom_call.1} parent=5 // pred_region
        %s223 = ssub.s32 %s13, 2
        // Predicated region
        $region37: #{tpu_custom_call.1} parent=35 // pred_check
          %p224 = pneg %p84
        $region38: #{tpu_custom_call.1} parent=35 // pred_check_branch
          %226 = sbr.rel (%p224) target = $region40
        $region39: #{tpu_custom_call.1} parent=35 // pred_region
          %s227 = sand.u32 %s69, 1
          %s228 = scalar_lea.sflag [#allocation4], %s227
          %s229 = sand.u32 %s69, 1
          %s230 = smul.addr %s229, 8
          %s231 = scalar_lea.vmem [#allocation5], %s230
          %232 = dma.done %s228, 128
        $region40: #{tpu_custom_call.1} parent=35 // pred_fallthru
          _
      $region36: #{tpu_custom_call.1} parent=5 // pred_fallthru
        _
    $region6: #{tpu_custom_call.1} parent=1 // loop_footer
      %s17 = sadd.s32 1, %s13
    $region7: #{tpu_custom_call.1} parent=1 // loop_footer_branch
      %12 = sbr.rel target = $region3
    $region8: #{tpu_custom_call.1} parent=1 // loop_exit
      _
    %233 = vsyncpa [#allocation3], 1
    %s234 = scalar_lea.sflag [#allocation3], 1
    %235 = vsyncpa %s234, 1
    %236 = vsyncpa [#allocation4], 1
    %s237 = scalar_lea.sflag [#allocation4], 1
    %238 = vsyncpa %s237, 1

</llo_original>
